<compile_context>
chip_gen: v5e
topology: v5e:2x2
jax: 0.10.0
libtpu: 0.0.40
codegen_flags: <defaults>
</compile_context>

<pallas_src>
import functools

import jax
import jax.numpy as jnp
from jax.experimental import pallas as pl
from jax.experimental.pallas import tpu as pltpu

HIDDEN = 64


def _round_up(n, m):
    return ((n + m - 1) // m) * m


def regressor_kernel(x_ref, w1_ref, b1_ref, w2_ref, b2_ref, o_ref):
    # fc1 on the MXU: (TM, F) f32 @ (F, 64) f32, f32 accumulation.
    h = jnp.dot(x_ref[...], w1_ref[...], preferred_element_type=jnp.float32)
    h = jnp.maximum(h + b1_ref[...], 0.0)            # bias + ReLU on the VPU
    # fc2 (64 -> 1) as an MXU matmul whose *output* axis is the batch:
    #   (1, 64) contracted with (TM, 64) over dim 64  ->  (1, TM)   (lane-dense row).
    row = jax.lax.dot_general(
        w2_ref[...], h,
        dimension_numbers=(((1,), (1,)), ((), ())),
        preferred_element_type=jnp.float32)
    o_ref[...] = row + b2_ref[0, 0]                  # scalar bias from SMEM


def _pick_tile(batch, in_features, *, target_block_bytes, num_cores=2):
    """Rows of x per grid step.

    - VMEM-budget driven: the streamed f32 x block is ~target_block_bytes (the pipeline
      double-buffers it), giving MiB-class tiles instead of ~100 KiB tiles.
    - Multiple of 128 so the lane-dense (1, TM) output row stores unmasked.
    - Capped near ceil(B / num_cores) so the parallel batch axis still produces >= 2
      grid steps for v7x megacore; harmless on single-TC v5e/v6e.
    """
    tm = max(128, (target_block_bytes // (4 * in_features)) // 128 * 128)
    tm = min(tm, _round_up(-(-batch // num_cores), 128))
    if tm >= batch:
        # Single tile covers the whole batch: shrink to the sublane-aligned minimum.
        tm = _round_up(batch, 8)
    return tm


@functools.partial(jax.jit, static_argnames=("target_block_bytes",))
def regressor_forward(x, w1, b1, w2, b2, *, target_block_bytes=4 * 1024 * 1024):
    """Fused Regressor forward: relu(x @ W1 + b1) @ W2 + b2.

    x: (B, F); w1: (F, 64); b1: (64,) or (1, 64); w2: (64, 1); b2: scalar-like.
    Returns (B, 1) float32.
    """
    B, F = x.shape
    x = x.astype(jnp.float32)
    w1 = w1.astype(jnp.float32)
    b1_row = jnp.reshape(b1, (1, HIDDEN)).astype(jnp.float32)
    w2_row = jnp.reshape(w2, (1, HIDDEN)).astype(jnp.float32)     # (64, 1) -> (1, 64)
    b2_s = jnp.reshape(jnp.asarray(b2, jnp.float32), (1, 1))

    tm = _pick_tile(B, F, target_block_bytes=target_block_bytes)
    grid_m = pl.cdiv(B, tm)

    # Only for tiny batches (single tile, B not sublane-aligned) do we pad x; the copy is
    # negligible there.  For multi-tile grids the (standard) partial last block is used,
    # so no wrapper-side pass over a large x is ever added.  Rows past B compute garbage
    # that is sliced away below (rows are independent).
    if grid_m == 1 and tm > B:
        x = jnp.pad(x, ((0, tm - B), (0, 0)))

    out = pl.pallas_call(
        regressor_kernel,
        out_shape=jax.ShapeDtypeStruct((grid_m, tm), jnp.float32),
        grid=(grid_m,),
        in_specs=[
            pl.BlockSpec((tm, F), lambda i: (i, 0)),              # x: streamed per tile
            pl.BlockSpec((F, HIDDEN), lambda i: (0, 0)),          # W1: resident in VMEM
            pl.BlockSpec((1, HIDDEN), lambda i: (0, 0)),          # b1: resident
            pl.BlockSpec((1, HIDDEN), lambda i: (0, 0)),          # W2 row: resident
            pl.BlockSpec(memory_space=pltpu.MemorySpace.SMEM),    # b2: scalar in SMEM
        ],
        out_specs=pl.BlockSpec((1, tm), lambda i: (i, 0)),        # lane-dense batch row
        compiler_params=pltpu.CompilerParams(
            # Batch axis is embarrassingly parallel -> megacore sharding on v7x.
            dimension_semantics=("parallel",),
        ),
    )(x, w1, b1_row, w2_row, b2_s)

    # Free layout plumbing back to the module's (B, 1) output.
    return out.reshape(grid_m * tm, 1)[:B]


def init_params(key, in_features, hidden=HIDDEN, out_features=1):
    """Mirror nn.Linear's U(-1/sqrt(fan_in), 1/sqrt(fan_in)); weights stored (in, out)."""
    k1, k2, k3, k4 = jax.random.split(key, 4)
    bound1 = 1.0 / jnp.sqrt(in_features)
    w1 = jax.random.uniform(k1, (in_features, hidden), jnp.float32, -bound1, bound1)
    b1 = jax.random.uniform(k2, (1, hidden), jnp.float32, -bound1, bound1)
    bound2 = 1.0 / jnp.sqrt(hidden)
    w2 = jax.random.uniform(k3, (hidden, out_features), jnp.float32, -bound2, bound2)
    b2 = jax.random.uniform(k4, (1, out_features), jnp.float32, -bound2, bound2)
    return w1, b1, w2, b2


if __name__ == "__main__":
    # configs.features_len = 8, configs.final_out_channels = 4  ->  in_features = 32
    features_len, final_out_channels = 8, 4
    in_features = features_len * final_out_channels
    batch = 8

    key = jax.random.PRNGKey(0)
    kx, kp = jax.random.split(key)
    x = jax.random.normal(kx, (batch, in_features), dtype=jnp.float32)
    w1, b1, w2, b2 = init_params(kp, in_features)

    out = jax.block_until_ready(regressor_forward(x, w1, b1, w2, b2))
    assert out.shape == (batch, 1)

    # Pure-f32 reference (same math class as the PyTorch module).
    hp = jax.lax.Precision.HIGHEST
    ref = jnp.maximum(jnp.dot(x, w1, precision=hp) + b1, 0.0)
    ref = jnp.dot(ref, w2, precision=hp) + b2
    assert jnp.allclose(out, ref, atol=2e-2, rtol=2e-2)

    print("KERNEL_OK")
</pallas_src>

<mosaic_0001>
module attributes {stable_mosaic.version = 11 : i64} {
  func.func @regressor_kernel(%arg0: i32, %arg1: memref<8x32xf32, #tpu.memory_space<vmem>>, %arg2: memref<32x64xf32, #tpu.memory_space<vmem>>, %arg3: memref<1x64xf32, #tpu.memory_space<vmem>>, %arg4: memref<1x64xf32, #tpu.memory_space<vmem>>, %arg5: memref<1x1xf32, #tpu.memory_space<smem>>, %arg6: memref<1x8xf32, #tpu.memory_space<vmem>>) attributes {dimension_semantics = [#tpu.dimension_semantics<parallel>], iteration_bounds = array<i64: 1>, scalar_prefetch = 0 : i64, scratch_operands = 0 : i64, tpu.core_type = #tpu.core_type<tc>, window_params = [{transform_indices = @transform_0, window_bounds = array<i64: 8, 32>}, {pipeline_mode = #tpu.pipeline_mode<synchronous>, transform_indices = @transform_1, window_bounds = array<i64: 32, 64>}, {pipeline_mode = #tpu.pipeline_mode<synchronous>, transform_indices = @transform_2, window_bounds = array<i64: 1, 64>}, {pipeline_mode = #tpu.pipeline_mode<synchronous>, transform_indices = @transform_3, window_bounds = array<i64: 1, 64>}, {transform_indices = @transform_4, window_bounds = array<i64: 1, 1>}, {transform_indices = @transform_5, window_bounds = array<i64: 1, 8>}]} {
    %c0 = arith.constant 0 : index
    %c0_0 = arith.constant 0 : index
    %0 = vector.load %arg1[%c0, %c0_0] : memref<8x32xf32, #tpu.memory_space<vmem>>, vector<8x32xf32>
    %c0_1 = arith.constant 0 : index
    %c0_2 = arith.constant 0 : index
    %1 = vector.load %arg2[%c0_1, %c0_2] : memref<32x64xf32, #tpu.memory_space<vmem>>, vector<32x64xf32>
    %cst = arith.constant dense<0.000000e+00> : vector<8x64xf32>
    %2 = tpu.matmul %0, %1, %cst {dimension_numbers = #tpu.dot_dimension_numbers<[1], [0], [0], [1], [0, 0, 1, 1], [], []>} : vector<8x32xf32>, vector<32x64xf32>, vector<8x64xf32> -> vector<8x64xf32>
    %c0_3 = arith.constant 0 : index
    %c0_4 = arith.constant 0 : index
    %3 = vector.load %arg3[%c0_3, %c0_4] : memref<1x64xf32, #tpu.memory_space<vmem>>, vector<1x64xf32>
    %4 = vector.broadcast %3 : vector<1x64xf32> to vector<8x64xf32>
    %5 = arith.addf %2, %4 : vector<8x64xf32>
    %cst_5 = arith.constant 0.000000e+00 : f32
    %6 = vector.broadcast %cst_5 : f32 to vector<8x64xf32>
    %7 = arith.maximumf %5, %6 : vector<8x64xf32>
    %c0_6 = arith.constant 0 : index
    %c0_7 = arith.constant 0 : index
    %8 = vector.load %arg4[%c0_6, %c0_7] : memref<1x64xf32, #tpu.memory_space<vmem>>, vector<1x64xf32>
    %cst_8 = arith.constant dense<0.000000e+00> : vector<1x8xf32>
    %9 = tpu.matmul %8, %7, %cst_8 {dimension_numbers = #tpu.dot_dimension_numbers<[1], [1], [0], [0], [0, 0, 1, 0], [], []>} : vector<1x64xf32>, vector<8x64xf32>, vector<1x8xf32> -> vector<1x8xf32>
    %c0_9 = arith.constant 0 : index
    %c0_10 = arith.constant 0 : index
    %10 = memref.load %arg5[%c0_9, %c0_10] : memref<1x1xf32, #tpu.memory_space<smem>>
    %11 = vector.broadcast %10 : f32 to vector<1x8xf32>
    %12 = arith.addf %9, %11 : vector<1x8xf32>
    %c0_11 = arith.constant 0 : index
    %c0_12 = arith.constant 0 : index
    %13 = vector.load %arg6[%c0_11, %c0_12] : memref<1x8xf32, #tpu.memory_space<vmem>>, vector<1x8xf32>
    tpu.vector_store %arg6[%c0_11, %c0_12], %12 {strides = array<i32>} : memref<1x8xf32, #tpu.memory_space<vmem>>, vector<1x8xf32>,
    return
  }
  func.func @transform_0(%arg0: i32) -> (i32, i32) {
    %c0_i32 = arith.constant 0 : i32
    %c0_i32_0 = arith.constant 0 : i32
    return %arg0, %c0_i32 : i32, i32
  }
  func.func @transform_1(%arg0: i32) -> (i32, i32) {
    %c0_i32 = arith.constant 0 : i32
    %c0_i32_0 = arith.constant 0 : i32
    %c0_i32_1 = arith.constant 0 : i32
    return %c0_i32, %c0_i32_0 : i32, i32
  }
  func.func @transform_2(%arg0: i32) -> (i32, i32) {
    %c0_i32 = arith.constant 0 : i32
    %c0_i32_0 = arith.constant 0 : i32
    %c0_i32_1 = arith.constant 0 : i32
    return %c0_i32, %c0_i32_0 : i32, i32
  }
  func.func @transform_3(%arg0: i32) -> (i32, i32) {
    %c0_i32 = arith.constant 0 : i32
    %c0_i32_0 = arith.constant 0 : i32
    %c0_i32_1 = arith.constant 0 : i32
    return %c0_i32, %c0_i32_0 : i32, i32
  }
  func.func @transform_4(%arg0: i32) -> (i32, i32) {
    %c0_i32 = arith.constant 0 : i32
    %c0_i32_0 = arith.constant 0 : i32
    %c0_i32_1 = arith.constant 0 : i32
    return %c0_i32, %c0_i32_0 : i32, i32
  }
  func.func @transform_5(%arg0: i32) -> (i32, i32) {
    %c0_i32 = arith.constant 0 : i32
    %c0_i32_0 = arith.constant 0 : i32
    return %arg0, %c0_i32 : i32, i32
  }
}

</mosaic_0001>

<llo_original>
// kernel: regressor_forward.1
$region0: #{regressor_forward.1}
  #allocation0 [shape = 'u32[]', space=smem, size = 0x4, offset = 0x4, fixed_abs, tag = 'smem constant byte address 0x4 - core index']
  #allocation1 [shape = 'u32[72,128]{1,0:T(1,128)}', space=vmem, size = 0x9000, scoped, tag = 'internal scratch']
  #allocation2 [shape = 'f32[1,1]{1,0:T(1,128)S(6)}', space=smem, size = 0x200, scoped, tag = 'scoped memory for regressor_forward.1']
  %s0 = inlined_call_operand.hbm [shape: f32[8,32], index: 0, kind: input, shape index: {}]
  %s1 = inlined_call_operand.hbm [shape: f32[32,64], index: 1, kind: input, shape index: {}]
  %s2 = inlined_call_operand.vmem [shape: f32[1,64], index: 2, kind: input, shape index: {}]
  %s3 = inlined_call_operand.vmem [shape: f32[1,64], index: 3, kind: input, shape index: {}]
  %s4 = inlined_call_operand.<no memory space> [shape: f32[1,1], index: 4, kind: input, shape index: {}]
  %s5 = inlined_call_operand.hbm [shape: f32[1,8], index: 5, kind: output, shape index: {}]
  %s6 = sld [smem:[#allocation0]]
  $region38: #{regressor_forward.1} parent=0
    _
  %s8 = ssub.s32 1, %s6
  %s9 = scalar_select 0, %s8, %s6
  %10 = sst [smem:[#allocation2]] %s4
  $region1: #{regressor_forward.1} parent=0
    #allocation3 [shape = 'u8[4096]{0}', space=vmem, size = 0x1000, scoped, tag = 'input window, operand 0, single buffered']
    #allocation4 [shape = 's32[1]{0}', space=sflag, size = 0x4, scoped, tag = 'scoped memory for regressor_forward.1']
    #allocation5 [shape = 's32[1]{0}', space=sflag, size = 0x4, scoped, tag = 'scoped memory for regressor_forward.1']
    #allocation6 [shape = 'u8[16384]{0}', space=vmem, size = 0x4000, scoped, tag = 'input window, operand 1, single buffered']
    #allocation7 [shape = 's32[1]{0}', space=sflag, size = 0x4, scoped, tag = 'scoped memory for regressor_forward.1']
    #allocation8 [shape = 'u8[512]{0}', space=vmem, size = 0x400, scoped, tag = 'output window, operand 0, single buffered']
    %11 = vsyncpa [#allocation4], 0
    %12 = vsyncpa [#allocation7], 0
    %13 = vsyncpa [#allocation5], 0
    // Predicated region
    $region2: #{regressor_forward.1} parent=1 // pred_check
      _
    $region3: #{regressor_forward.1} parent=1 // pred_check_branch
      %15 = sbr.rel (0) target = $region5
    $region4: #{regressor_forward.1} parent=1 // pred_region
      %17 = vsyncadd [#allocation4], 0
      %s19 = sshll.u32 %s0, 4
      %s20 = int_to_ptr.hbm [resolvable:$true] %s19
      %s21 = sshll.u32 [#allocation3], 4
      %s22 = int_to_ptr.vmem [resolvable:$true] %s21
      %24 = dma.hbm_to_vmem [thread:$0]  %s20, 128, %s22, [#allocation4]
    $region5: #{regressor_forward.1} parent=1 // pred_fallthru
      _
    // Predicated region
    $region6: #{regressor_forward.1} parent=1 // pred_check
      _
    $region7: #{regressor_forward.1} parent=1 // pred_check_branch
      %26 = sbr.rel (0) target = $region9
    $region8: #{regressor_forward.1} parent=1 // pred_region
      %28 = vsyncadd [#allocation7], 0
      %s29 = sshll.u32 %s1, 4
      %s30 = int_to_ptr.hbm [resolvable:$true] %s29
      %s31 = sshll.u32 [#allocation6], 4
      %s32 = int_to_ptr.vmem [resolvable:$true] %s31
      %37 = dma.hbm_to_vmem [thread:$0]  %s30, 512, %s32, [#allocation7], 128, 128, 8
    $region9: #{regressor_forward.1} parent=1 // pred_fallthru
      _
    // Predicated region
    $region10: #{regressor_forward.1} parent=1 // pred_check
      _
    $region11: #{regressor_forward.1} parent=1 // pred_check_branch
      %39 = sbr.rel (0) target = $region13
    $region12: #{regressor_forward.1} parent=1 // pred_region
      _
    $region13: #{regressor_forward.1} parent=1 // pred_fallthru
      _
    // Predicated region
    $region14: #{regressor_forward.1} parent=1 // pred_check
      _
    $region15: #{regressor_forward.1} parent=1 // pred_check_branch
      %41 = sbr.rel (0) target = $region17
    $region16: #{regressor_forward.1} parent=1 // pred_region
      _
    $region17: #{regressor_forward.1} parent=1 // pred_fallthru
      _
    // Predicated region
    $region18: #{regressor_forward.1} parent=1 // pred_check
      _
    $region19: #{regressor_forward.1} parent=1 // pred_check_branch
      %43 = sbr.rel (0) target = $region21
    $region20: #{regressor_forward.1} parent=1 // pred_region
      _
    $region21: #{regressor_forward.1} parent=1 // pred_fallthru
      _
    // Predicated region
    $region22: #{regressor_forward.1} parent=1 // pred_check
      _
    $region23: #{regressor_forward.1} parent=1 // pred_check_branch
      %45 = sbr.rel (0) target = $region25
    $region24: #{regressor_forward.1} parent=1 // pred_region
      %47 = dma.done [#allocation4], 128
    $region25: #{regressor_forward.1} parent=1 // pred_fallthru
      _
    // Predicated region
    $region26: #{regressor_forward.1} parent=1 // pred_check
      _
    $region27: #{regressor_forward.1} parent=1 // pred_check_branch
      %49 = sbr.rel (0) target = $region29
    $region28: #{regressor_forward.1} parent=1 // pred_region
      %51 = dma.done [#allocation7], 512
    $region29: #{regressor_forward.1} parent=1 // pred_fallthru
      _
    %v52 = vld [vmem:[#allocation3] sm:$0xff]
    %v53 = vld [vmem:[#allocation6] sm:$0xff]
    %v54 = vld [vmem:[#allocation6 + $0x8] sm:$0xff]
    %v55 = vld [vmem:[#allocation6 + $0x10] sm:$0xff]
    %v56 = vld [vmem:[#allocation6 + $0x18] sm:$0xff]
    %v57 = vld [vmem:[%s2] sm:$0x1]
    %v59 = vperm.slane %v57, 0
    %vm61 = vcmask 261120
    %v63 = vsel %vm61, %v52, 0
    %65 = vmatpush.msra.mxu0 0.0
    %66 = vmatpush.msra.mxu0 0.0
    %67 = vmatpush.msra.mxu0 0.0
    %68 = vmatpush.msra.mxu0 0.0
    %69 = vmatpush.msra.mxu0 0.0
    %70 = vmatpush.msra.mxu0 0.0
    %71 = vmatpush.msra.mxu0 0.0
    %72 = vmatpush.msra.mxu0 0.0
    %73 = vmatpush.msra.mxu0 0.0
    %74 = vmatpush.msra.mxu0 0.0
    %75 = vmatpush.msra.mxu0 0.0
    %76 = vmatpush.msra.mxu0 0.0
    %77 = vmatpush.msra.mxu0 %v56
    %78 = vmatpush.msra.mxu0 %v55
    %79 = vmatpush.msra.mxu0 %v54
    %80 = vmatpush.msra.mxu0 %v53
    %81 = vmatmul.f32.gmra.mxu0 %v63
    %v82 = vpop.f32.mrf.mxu0
    %v83 = vadd.f32 %v59, %v82
    %84 = vdwg.mxu0
    %v85 = vmax.f32 %v83, 0.0
    %v86 = vld [vmem:[%s3] sm:$0x1]
    %s87 = sld [smem:[#allocation2]]
    %v88 = vstv %s87
    %vm89 = vcmask 523264
    %v91 = vsel %vm89, %v86, 0
    %v94 = vsel %vm89, %v85, 0
    %96 = vmatpush.xpose.msra.mxu0 0.0
    %97 = vmatpush.xpose.msra.mxu0 0.0
    %98 = vmatpush.xpose.msra.mxu0 0.0
    %99 = vmatpush.xpose.msra.mxu0 0.0
    %100 = vmatpush.xpose.msra.mxu0 0.0
    %101 = vmatpush.xpose.msra.mxu0 0.0
    %102 = vmatpush.xpose.msra.mxu0 0.0
    %103 = vmatpush.xpose.msra.mxu0 0.0
    %104 = vmatpush.xpose.msra.mxu0 0.0
    %105 = vmatpush.xpose.msra.mxu0 0.0
    %106 = vmatpush.xpose.msra.mxu0 0.0
    %107 = vmatpush.xpose.msra.mxu0 0.0
    %108 = vmatpush.xpose.msra.mxu0 0.0
    %109 = vmatpush.xpose.msra.mxu0 0.0
    %110 = vmatpush.xpose.msra.mxu0 0.0
    %111 = vmatpush.xpose.msra.mxu0 %v94
    %112 = vmatmul.f32.gmra.mxu0 %v91
    %v113 = vpop.f32.mrf.mxu0
    %v114 = vadd.f32 %v88, %v113
    %115 = vdwg.mxu0
    %vm116 = vcmask 57344
    %117 = vst.msk [vmem:[#allocation8] sm:$0x1] %vm116, %v114
    // Predicated region
    $region30: #{regressor_forward.1} parent=1 // pred_check
      _
    $region31: #{regressor_forward.1} parent=1 // pred_check_branch
      %119 = sbr.rel (0) target = $region33
    $region32: #{regressor_forward.1} parent=1 // pred_region
      %121 = vsyncadd [#allocation5], 0
      %s123 = sshll.u32 [#allocation8], 4
      %s124 = int_to_ptr.vmem [resolvable:$true] %s123
      %s125 = sshll.u32 %s5, 4
      %s126 = int_to_ptr.hbm [resolvable:$true] %s125
      %128 = dma.vmem_to_hbm [thread:$0]  %s124, 16, %s126, [#allocation5]
    $region33: #{regressor_forward.1} parent=1 // pred_fallthru
      _
    // Predicated region
    $region34: #{regressor_forward.1} parent=1 // pred_check
      _
    $region35: #{regressor_forward.1} parent=1 // pred_check_branch
      %130 = sbr.rel (0) target = $region37
    $region36: #{regressor_forward.1} parent=1 // pred_region
      %132 = dma.done [#allocation5], 16
    $region37: #{regressor_forward.1} parent=1 // pred_fallthru
      _
    %133 = vsyncpa [#allocation4], 1
    %134 = vsyncpa [#allocation7], 1
    %135 = vsyncpa [#allocation5], 1

</llo_original>
